<compile_context>
chip_gen: v7x
topology: tpu7x:2x2x1
jax: 0.10.0
libtpu: 0.0.40
codegen_flags: <defaults>
</compile_context>

<pallas_src>
import functools

import jax
import jax.numpy as jnp
from jax import lax
from jax.experimental import pallas as pl
from jax.experimental.pallas import tpu as pltpu

LANE = 128
ROW_ALIGN = 16  # bf16 sublane packing: 16 rows per vreg


def _round_up(x, m):
    return (x + m - 1) // m * m


# ----------------------------------------------------------------------------- kernel
def _projector(x, wae, bae, w1, b1, w2, b2):
    # synthetic autoencoder encoder: h = relu(x @ Wae + bae)
    h = jnp.dot(x, wae, preferred_element_type=jnp.float32)
    h = jnp.maximum(h + bae, 0.0)
    # instance projector: Linear -> ReLU -> Linear (bf16 MXU inputs, f32 accum)
    t = jnp.dot(h.astype(w1.dtype), w1, preferred_element_type=jnp.float32)
    t = jnp.maximum(t + b1, 0.0)
    z = jnp.dot(t.astype(w2.dtype), w2, preferred_element_type=jnp.float32) + b2
    # L2 normalize along feature lanes (padded lanes are exactly zero)
    sumsq = jnp.sum(z * z, axis=1, keepdims=True)
    inv = lax.rsqrt(jnp.maximum(sumsq, 1e-24))  # == 1 / max(||z||, 1e-12)
    return z * inv


def _network_kernel(xi_ref, xj_ref, wae_ref, bae_ref, w1_ref, b1_ref, w2_ref, b2_ref,
                    zi_ref, zj_ref):
    wae = wae_ref[...]
    bae = bae_ref[...]
    w1 = w1_ref[...]
    b1 = b1_ref[...]
    w2 = w2_ref[...]
    b2 = b2_ref[...]
    # Both views share the resident weights inside one grid step.
    zi_ref[...] = _projector(xi_ref[...].astype(wae.dtype), wae, bae, w1, b1, w2, b2)
    zj_ref[...] = _projector(xj_ref[...].astype(wae.dtype), wae, bae, w1, b1, w2, b2)


# ----------------------------------------------------------------- one-time param prep
def _pad2(a, rows, cols, dtype):
    out = jnp.zeros((rows, cols), dtype)
    return out.at[: a.shape[0], : a.shape[1]].set(a.astype(dtype))


def prepare_params(params):
    """One-time prep: zero-pad output lane dims to 128 and cast weights to bf16.

    Call once; reuse the result for every `network_forward` call so no per-call
    padding / casting traffic sits in front of the kernel.
    """
    wae, bae, w1, b1, w2, b2 = params
    input_dim, rep_dim = wae.shape
    feature_dim = w2.shape[1]
    rep_p = _round_up(rep_dim, LANE)
    feat_p = _round_up(feature_dim, LANE)
    prepared = (
        _pad2(wae, input_dim, rep_p, jnp.bfloat16),  # x lane dim stays unpadded
        _pad2(bae, 1, rep_p, jnp.float32),
        _pad2(w1, rep_p, rep_p, jnp.bfloat16),
        _pad2(b1, 1, rep_p, jnp.float32),
        _pad2(w2, rep_p, feat_p, jnp.bfloat16),
        _pad2(b2, 1, feat_p, jnp.float32),
    )
    return prepared, feature_dim


# --------------------------------------------------------------------------- forward
@functools.partial(jax.jit, static_argnames=("feature_dim",))
def network_forward(x_i, x_j, prepared, *, feature_dim):
    """Mirrors Network.forward: returns (z_i, z_j), each L2-normalized along dim=1."""
    wae_p, bae_p, w1_p, b1_p, w2_p, b2_p = prepared
    B, input_dim = x_i.shape
    rep_p = wae_p.shape[1]
    feat_p = w2_p.shape[1]

    # Batch tiling: rows a multiple of 16; >= 2 grid steps whenever the batch permits
    # (v7x 2-TC sharding via "parallel"); padding bounded by one tile.
    # TODO(synk): sweep the 256-row cap (single-TC v6e/v5e prefer larger tiles).
    bp = _round_up(B, ROW_ALIGN)
    if bp <= ROW_ALIGN:
        tm = bp
    else:
        n_steps = max(2, pl.cdiv(bp, 256))
        tm = _round_up(pl.cdiv(bp, n_steps), ROW_ALIGN)
    grid_m = pl.cdiv(bp, tm)
    bp = grid_m * tm

    def stage(x):
        # At most one fused lax.pad per view; no concat / zeros+scatter staging.
        if x.shape[0] == bp:
            return x
        return jnp.pad(x, ((0, bp - x.shape[0]), (0, 0)))

    xi = stage(x_i)
    xj = stage(x_j)

    resident = lambda a: pl.BlockSpec(a.shape, lambda i: (0, 0))

    # Explicit scoped-VMEM budget from the footprint: (double-buffered) x/z tiles for
    # both views + resident weights (2x for default double-buffering) + f32
    # intermediates headroom.
    itemsize = x_i.dtype.itemsize
    weight_bytes = sum(int(a.size) * a.dtype.itemsize
                       for a in (wae_p, bae_p, w1_p, b1_p, w2_p, b2_p))
    step_bytes = 2 * tm * (input_dim * itemsize + feat_p * 4)
    interm_bytes = 6 * tm * max(rep_p, feat_p) * 4
    vmem_limit = int(min(100 << 20,
                         max(32 << 20,
                             2 * weight_bytes + 2 * step_bytes + interm_bytes + (4 << 20))))

    z_i, z_j = pl.pallas_call(
        _network_kernel,
        out_shape=(jax.ShapeDtypeStruct((bp, feat_p), jnp.float32),
                   jax.ShapeDtypeStruct((bp, feat_p), jnp.float32)),
        grid_spec=pltpu.PrefetchScalarGridSpec(
            num_scalar_prefetch=0,
            grid=(grid_m,),
            in_specs=[
                pl.BlockSpec((tm, input_dim), lambda i: (i, 0)),  # x_i tile
                pl.BlockSpec((tm, input_dim), lambda i: (i, 0)),  # x_j tile
                resident(wae_p), resident(bae_p),                 # weights resident
                resident(w1_p), resident(b1_p),
                resident(w2_p), resident(b2_p),
            ],
            out_specs=[pl.BlockSpec((tm, feat_p), lambda i: (i, 0)),
                       pl.BlockSpec((tm, feat_p), lambda i: (i, 0))],
        ),
        compiler_params=pltpu.CompilerParams(
            dimension_semantics=("parallel",),
            vmem_limit_bytes=vmem_limit,
        ),
    )(xi, xj, wae_p, bae_p, w1_p, b1_p, w2_p, b2_p)

    return z_i[:B, :feature_dim], z_j[:B, :feature_dim]


# ----------------------------------------------------------------------------- params
def init_params(key, input_dim, rep_dim, feature_dim):
    ks = jax.random.split(key, 6)

    def lin(kw, kb, fan_in, fan_out):
        bound = 1.0 / jnp.sqrt(fan_in)
        w = jax.random.uniform(kw, (fan_in, fan_out), jnp.float32, -bound, bound)
        b = jax.random.uniform(kb, (1, fan_out), jnp.float32, -bound, bound)
        return w, b

    wae, bae = lin(ks[0], ks[1], input_dim, rep_dim)   # synthetic ae encoder
    w1, b1 = lin(ks[2], ks[3], rep_dim, rep_dim)       # instance_projector[0]
    w2, b2 = lin(ks[4], ks[5], rep_dim, feature_dim)   # instance_projector[2]
    return (wae, bae, w1, b1, w2, b2)


if __name__ == "__main__":
    key = jax.random.PRNGKey(0)
    B, input_dim, rep_dim, feature_dim = 8, 32, 32, 16

    k_xi, k_xj, k_p = jax.random.split(key, 3)
    x_i = jax.random.normal(k_xi, (B, input_dim), jnp.float32)
    x_j = jax.random.normal(k_xj, (B, input_dim), jnp.float32)
    params = init_params(k_p, input_dim, rep_dim, feature_dim)

    # One-time parameter prep (padding + bf16 cast), reused across calls.
    prepared, feat_dim = prepare_params(params)
    prepared = jax.block_until_ready(prepared)

    z_i, z_j = network_forward(x_i, x_j, prepared, feature_dim=feat_dim)
    jax.block_until_ready((z_i, z_j))

    wae, bae, w1, b1, w2, b2 = params

    def ref_f32(x):
        h = jnp.maximum(x @ wae + bae, 0.0)
        t = jnp.maximum(h @ w1 + b1, 0.0)
        z = t @ w2 + b2
        return z / jnp.maximum(jnp.linalg.norm(z, axis=1, keepdims=True), 1e-12)

    def ref_bf16(x):
        bf = jnp.bfloat16
        h = jnp.maximum(
            jnp.dot(x.astype(bf), wae.astype(bf), preferred_element_type=jnp.float32)
            + bae, 0.0)
        t = jnp.maximum(
            jnp.dot(h.astype(bf), w1.astype(bf), preferred_element_type=jnp.float32)
            + b1, 0.0)
        z = jnp.dot(t.astype(bf), w2.astype(bf), preferred_element_type=jnp.float32) + b2
        return z / jnp.maximum(jnp.linalg.norm(z, axis=1, keepdims=True), 1e-12)

    # Strict check against a reference mimicking the kernel's bf16-matmul / f32-accum dtypes.
    assert jnp.allclose(z_i, ref_bf16(x_i), atol=2e-3), "z_i mismatch vs bf16 reference"
    assert jnp.allclose(z_j, ref_bf16(x_j), atol=2e-3), "z_j mismatch vs bf16 reference"
    # Loose check against the full-f32 reference (bf16 matmul-input rounding only).
    assert jnp.allclose(z_i, ref_f32(x_i), atol=5e-2), "z_i mismatch vs f32 reference"
    assert jnp.allclose(z_j, ref_f32(x_j), atol=5e-2), "z_j mismatch vs f32 reference"

    print("KERNEL_OK")
</pallas_src>

<mosaic_0001>
module attributes {stable_mosaic.version = 11 : i64} {
  func.func @_network_kernel(%arg0: i32, %arg1: memref<16x32xf32, #tpu.memory_space<vmem>>, %arg2: memref<16x32xf32, #tpu.memory_space<vmem>>, %arg3: memref<32x128xbf16, #tpu.memory_space<vmem>>, %arg4: memref<1x128xf32, #tpu.memory_space<vmem>>, %arg5: memref<128x128xbf16, #tpu.memory_space<vmem>>, %arg6: memref<1x128xf32, #tpu.memory_space<vmem>>, %arg7: memref<128x128xbf16, #tpu.memory_space<vmem>>, %arg8: memref<1x128xf32, #tpu.memory_space<vmem>>, %arg9: memref<16x128xf32, #tpu.memory_space<vmem>>, %arg10: memref<16x128xf32, #tpu.memory_space<vmem>>) attributes {dimension_semantics = [#tpu.dimension_semantics<parallel>], iteration_bounds = array<i64: 1>, scalar_prefetch = 0 : i64, scratch_operands = 0 : i64, tpu.core_type = #tpu.core_type<tc>, window_params = [{transform_indices = @transform_0, window_bounds = array<i64: 16, 32>}, {transform_indices = @transform_1, window_bounds = array<i64: 16, 32>}, {pipeline_mode = #tpu.pipeline_mode<synchronous>, transform_indices = @transform_2, window_bounds = array<i64: 32, 128>}, {pipeline_mode = #tpu.pipeline_mode<synchronous>, transform_indices = @transform_3, window_bounds = array<i64: 1, 128>}, {pipeline_mode = #tpu.pipeline_mode<synchronous>, transform_indices = @transform_4, window_bounds = array<i64: 128, 128>}, {pipeline_mode = #tpu.pipeline_mode<synchronous>, transform_indices = @transform_5, window_bounds = array<i64: 1, 128>}, {pipeline_mode = #tpu.pipeline_mode<synchronous>, transform_indices = @transform_6, window_bounds = array<i64: 128, 128>}, {pipeline_mode = #tpu.pipeline_mode<synchronous>, transform_indices = @transform_7, window_bounds = array<i64: 1, 128>}, {transform_indices = @transform_8, window_bounds = array<i64: 16, 128>}, {transform_indices = @transform_9, window_bounds = array<i64: 16, 128>}]} {
    %c0 = arith.constant 0 : index
    %c0_0 = arith.constant 0 : index
    %0 = vector.load %arg3[%c0, %c0_0] : memref<32x128xbf16, #tpu.memory_space<vmem>>, vector<32x128xbf16>
    %c0_1 = arith.constant 0 : index
    %c0_2 = arith.constant 0 : index
    %1 = vector.load %arg4[%c0_1, %c0_2] : memref<1x128xf32, #tpu.memory_space<vmem>>, vector<1x128xf32>
    %c0_3 = arith.constant 0 : index
    %c0_4 = arith.constant 0 : index
    %2 = vector.load %arg5[%c0_3, %c0_4] : memref<128x128xbf16, #tpu.memory_space<vmem>>, vector<128x128xbf16>
    %c0_5 = arith.constant 0 : index
    %c0_6 = arith.constant 0 : index
    %3 = vector.load %arg6[%c0_5, %c0_6] : memref<1x128xf32, #tpu.memory_space<vmem>>, vector<1x128xf32>
    %c0_7 = arith.constant 0 : index
    %c0_8 = arith.constant 0 : index
    %4 = vector.load %arg7[%c0_7, %c0_8] : memref<128x128xbf16, #tpu.memory_space<vmem>>, vector<128x128xbf16>
    %c0_9 = arith.constant 0 : index
    %c0_10 = arith.constant 0 : index
    %5 = vector.load %arg8[%c0_9, %c0_10] : memref<1x128xf32, #tpu.memory_space<vmem>>, vector<1x128xf32>
    %c0_11 = arith.constant 0 : index
    %c0_12 = arith.constant 0 : index
    %6 = vector.load %arg1[%c0_11, %c0_12] : memref<16x32xf32, #tpu.memory_space<vmem>>, vector<16x32xf32>
    %7 = arith.truncf %6 : vector<16x32xf32> to vector<16x32xbf16>
    %cst = arith.constant dense<0.000000e+00> : vector<16x128xf32>
    %8 = tpu.matmul %7, %0, %cst {dimension_numbers = #tpu.dot_dimension_numbers<[1], [0], [0], [1], [0, 0, 1, 1], [], []>} : vector<16x32xbf16>, vector<32x128xbf16>, vector<16x128xf32> -> vector<16x128xf32>
    %9 = vector.broadcast %1 : vector<1x128xf32> to vector<16x128xf32>
    %10 = arith.addf %8, %9 : vector<16x128xf32>
    %cst_13 = arith.constant 0.000000e+00 : f32
    %11 = vector.broadcast %cst_13 : f32 to vector<16x128xf32>
    %12 = arith.maximumf %10, %11 : vector<16x128xf32>
    %13 = arith.truncf %12 : vector<16x128xf32> to vector<16x128xbf16>
    %cst_14 = arith.constant dense<0.000000e+00> : vector<16x128xf32>
    %14 = tpu.matmul %13, %2, %cst_14 {dimension_numbers = #tpu.dot_dimension_numbers<[1], [0], [0], [1], [0, 0, 1, 1], [], []>} : vector<16x128xbf16>, vector<128x128xbf16>, vector<16x128xf32> -> vector<16x128xf32>
    %15 = vector.broadcast %3 : vector<1x128xf32> to vector<16x128xf32>
    %16 = arith.addf %14, %15 : vector<16x128xf32>
    %cst_15 = arith.constant 0.000000e+00 : f32
    %17 = vector.broadcast %cst_15 : f32 to vector<16x128xf32>
    %18 = arith.maximumf %16, %17 : vector<16x128xf32>
    %19 = arith.truncf %18 : vector<16x128xf32> to vector<16x128xbf16>
    %cst_16 = arith.constant dense<0.000000e+00> : vector<16x128xf32>
    %20 = tpu.matmul %19, %4, %cst_16 {dimension_numbers = #tpu.dot_dimension_numbers<[1], [0], [0], [1], [0, 0, 1, 1], [], []>} : vector<16x128xbf16>, vector<128x128xbf16>, vector<16x128xf32> -> vector<16x128xf32>
    %21 = vector.broadcast %5 : vector<1x128xf32> to vector<16x128xf32>
    %22 = arith.addf %20, %21 : vector<16x128xf32>
    %23 = arith.mulf %22, %22 : vector<16x128xf32>
    %cst_17 = arith.constant dense<0.000000e+00> : vector<16xf32>
    %24 = vector.multi_reduction <add>, %23, %cst_17 [1] : vector<16x128xf32> to vector<16xf32>
    %25 = vector.shape_cast %24 : vector<16xf32> to vector<16x1xf32>
    %cst_18 = arith.constant 1.000000e-24 : f32
    %26 = vector.broadcast %cst_18 : f32 to vector<16x1xf32>
    %27 = arith.maximumf %25, %26 : vector<16x1xf32>
    %28 = math.rsqrt %27 : vector<16x1xf32>
    %29 = vector.broadcast %28 : vector<16x1xf32> to vector<16x128xf32>
    %30 = arith.mulf %22, %29 : vector<16x128xf32>
    %c0_19 = arith.constant 0 : index
    %c0_20 = arith.constant 0 : index
    %31 = vector.load %arg9[%c0_19, %c0_20] : memref<16x128xf32, #tpu.memory_space<vmem>>, vector<16x128xf32>
    tpu.vector_store %arg9[%c0_19, %c0_20], %30 {strides = array<i32>} : memref<16x128xf32, #tpu.memory_space<vmem>>, vector<16x128xf32>,
    %c0_21 = arith.constant 0 : index
    %c0_22 = arith.constant 0 : index
    %32 = vector.load %arg2[%c0_21, %c0_22] : memref<16x32xf32, #tpu.memory_space<vmem>>, vector<16x32xf32>
    %33 = arith.truncf %32 : vector<16x32xf32> to vector<16x32xbf16>
    %cst_23 = arith.constant dense<0.000000e+00> : vector<16x128xf32>
    %34 = tpu.matmul %33, %0, %cst_23 {dimension_numbers = #tpu.dot_dimension_numbers<[1], [0], [0], [1], [0, 0, 1, 1], [], []>} : vector<16x32xbf16>, vector<32x128xbf16>, vector<16x128xf32> -> vector<16x128xf32>
    %35 = vector.broadcast %1 : vector<1x128xf32> to vector<16x128xf32>
    %36 = arith.addf %34, %35 : vector<16x128xf32>
    %cst_24 = arith.constant 0.000000e+00 : f32
    %37 = vector.broadcast %cst_24 : f32 to vector<16x128xf32>
    %38 = arith.maximumf %36, %37 : vector<16x128xf32>
    %39 = arith.truncf %38 : vector<16x128xf32> to vector<16x128xbf16>
    %cst_25 = arith.constant dense<0.000000e+00> : vector<16x128xf32>
    %40 = tpu.matmul %39, %2, %cst_25 {dimension_numbers = #tpu.dot_dimension_numbers<[1], [0], [0], [1], [0, 0, 1, 1], [], []>} : vector<16x128xbf16>, vector<128x128xbf16>, vector<16x128xf32> -> vector<16x128xf32>
    %41 = vector.broadcast %3 : vector<1x128xf32> to vector<16x128xf32>
    %42 = arith.addf %40, %41 : vector<16x128xf32>
    %cst_26 = arith.constant 0.000000e+00 : f32
    %43 = vector.broadcast %cst_26 : f32 to vector<16x128xf32>
    %44 = arith.maximumf %42, %43 : vector<16x128xf32>
    %45 = arith.truncf %44 : vector<16x128xf32> to vector<16x128xbf16>
    %cst_27 = arith.constant dense<0.000000e+00> : vector<16x128xf32>
    %46 = tpu.matmul %45, %4, %cst_27 {dimension_numbers = #tpu.dot_dimension_numbers<[1], [0], [0], [1], [0, 0, 1, 1], [], []>} : vector<16x128xbf16>, vector<128x128xbf16>, vector<16x128xf32> -> vector<16x128xf32>
    %47 = vector.broadcast %5 : vector<1x128xf32> to vector<16x128xf32>
    %48 = arith.addf %46, %47 : vector<16x128xf32>
    %49 = arith.mulf %48, %48 : vector<16x128xf32>
    %cst_28 = arith.constant dense<0.000000e+00> : vector<16xf32>
    %50 = vector.multi_reduction <add>, %49, %cst_28 [1] : vector<16x128xf32> to vector<16xf32>
    %51 = vector.shape_cast %50 : vector<16xf32> to vector<16x1xf32>
    %cst_29 = arith.constant 1.000000e-24 : f32
    %52 = vector.broadcast %cst_29 : f32 to vector<16x1xf32>
    %53 = arith.maximumf %51, %52 : vector<16x1xf32>
    %54 = math.rsqrt %53 : vector<16x1xf32>
    %55 = vector.broadcast %54 : vector<16x1xf32> to vector<16x128xf32>
    %56 = arith.mulf %48, %55 : vector<16x128xf32>
    %c0_30 = arith.constant 0 : index
    %c0_31 = arith.constant 0 : index
    %57 = vector.load %arg10[%c0_30, %c0_31] : memref<16x128xf32, #tpu.memory_space<vmem>>, vector<16x128xf32>
    tpu.vector_store %arg10[%c0_30, %c0_31], %56 {strides = array<i32>} : memref<16x128xf32, #tpu.memory_space<vmem>>, vector<16x128xf32>,
    return
  }
  func.func @transform_0(%arg0: i32) -> (i32, i32) {
    %c0_i32 = arith.constant 0 : i32
    %c0_i32_0 = arith.constant 0 : i32
    return %arg0, %c0_i32 : i32, i32
  }
  func.func @transform_1(%arg0: i32) -> (i32, i32) {
    %c0_i32 = arith.constant 0 : i32
    %c0_i32_0 = arith.constant 0 : i32
    return %arg0, %c0_i32 : i32, i32
  }
  func.func @transform_2(%arg0: i32) -> (i32, i32) {
    %c0_i32 = arith.constant 0 : i32
    %c0_i32_0 = arith.constant 0 : i32
    %c0_i32_1 = arith.constant 0 : i32
    return %c0_i32, %c0_i32_0 : i32, i32
  }
  func.func @transform_3(%arg0: i32) -> (i32, i32) {
    %c0_i32 = arith.constant 0 : i32
    %c0_i32_0 = arith.constant 0 : i32
    %c0_i32_1 = arith.constant 0 : i32
    return %c0_i32, %c0_i32_0 : i32, i32
  }
  func.func @transform_4(%arg0: i32) -> (i32, i32) {
    %c0_i32 = arith.constant 0 : i32
    %c0_i32_0 = arith.constant 0 : i32
    %c0_i32_1 = arith.constant 0 : i32
    return %c0_i32, %c0_i32_0 : i32, i32
  }
  func.func @transform_5(%arg0: i32) -> (i32, i32) {
    %c0_i32 = arith.constant 0 : i32
    %c0_i32_0 = arith.constant 0 : i32
    %c0_i32_1 = arith.constant 0 : i32
    return %c0_i32, %c0_i32_0 : i32, i32
  }
  func.func @transform_6(%arg0: i32) -> (i32, i32) {
    %c0_i32 = arith.constant 0 : i32
    %c0_i32_0 = arith.constant 0 : i32
    %c0_i32_1 = arith.constant 0 : i32
    return %c0_i32, %c0_i32_0 : i32, i32
  }
  func.func @transform_7(%arg0: i32) -> (i32, i32) {
    %c0_i32 = arith.constant 0 : i32
    %c0_i32_0 = arith.constant 0 : i32
    %c0_i32_1 = arith.constant 0 : i32
    return %c0_i32, %c0_i32_0 : i32, i32
  }
  func.func @transform_8(%arg0: i32) -> (i32, i32) {
    %c0_i32 = arith.constant 0 : i32
    %c0_i32_0 = arith.constant 0 : i32
    return %arg0, %c0_i32 : i32, i32
  }
  func.func @transform_9(%arg0: i32) -> (i32, i32) {
    %c0_i32 = arith.constant 0 : i32
    %c0_i32_0 = arith.constant 0 : i32
    return %arg0, %c0_i32 : i32, i32
  }
}

</mosaic_0001>

<llo_original>
// kernel: network_forward.1
$region0: #{network_forward.1}
  #allocation0 [shape = 'u32[]', space=smem, size = 0x4, offset = 0x4, fixed_abs, tag = 'smem constant byte address 0x4 - core index']
  #allocation1 [shape = 'u32[144,128]{1,0:T(1,128)}', space=vmem, size = 0x12000, scoped, tag = 'internal scratch']
  %s0 = inlined_call_operand.vmem [shape: f32[16,32], index: 0, kind: input, shape index: {}]
  %s1 = inlined_call_operand.vmem [shape: f32[16,32], index: 1, kind: input, shape index: {}]
  %s2 = inlined_call_operand.hbm [shape: bf16[32,128], index: 2, kind: input, shape index: {}]
  %s3 = inlined_call_operand.vmem [shape: f32[1,128], index: 3, kind: input, shape index: {}]
  %s4 = inlined_call_operand.vmem [shape: bf16[128,128], index: 4, kind: input, shape index: {}]
  %s5 = inlined_call_operand.vmem [shape: f32[1,128], index: 5, kind: input, shape index: {}]
  %s6 = inlined_call_operand.hbm [shape: bf16[128,128], index: 6, kind: input, shape index: {}]
  %s7 = inlined_call_operand.vmem [shape: f32[1,128], index: 7, kind: input, shape index: {}]
  %s8 = inlined_call_operand.vmem [shape: f32[16,128], index: 8, kind: output, shape index: {0}]
  %s9 = inlined_call_operand.vmem [shape: f32[16,128], index: 9, kind: output, shape index: {1}]
  %10 = xla_tuple %s8, %s9
  %s11 = sld [smem:[#allocation0]]
  $region58: #{network_forward.1} parent=0
    _
  %s13 = ssub.s32 1, %s11
  %s14 = scalar_select 0, %s13, %s11
  $region1: #{network_forward.1} parent=0
    #allocation2 [shape = 'u8[8192]{0}', space=vmem, size = 0x2000, scoped, tag = 'input window, operand 2, single buffered']
    #allocation3 [shape = 's32[1]{0}', space=sflag, size = 0x4, scoped, tag = 'scoped memory for network_forward.1']
    #allocation4 [shape = 'u8[32768]{0}', space=vmem, size = 0x8000, scoped, tag = 'input window, operand 6, single buffered']
    #allocation5 [shape = 's32[1]{0}', space=sflag, size = 0x4, scoped, tag = 'scoped memory for network_forward.1']
    %15 = vsyncpa [#allocation3], 0
    %16 = vsyncpa [#allocation5], 0
    // Predicated region
    $region2: #{network_forward.1} parent=1 // pred_check
      _
    $region3: #{network_forward.1} parent=1 // pred_check_branch
      %18 = sbr.rel (0) target = $region5
    $region4: #{network_forward.1} parent=1 // pred_region
      _
    $region5: #{network_forward.1} parent=1 // pred_fallthru
      _
    // Predicated region
    $region6: #{network_forward.1} parent=1 // pred_check
      _
    $region7: #{network_forward.1} parent=1 // pred_check_branch
      %20 = sbr.rel (0) target = $region9
    $region8: #{network_forward.1} parent=1 // pred_region
      _
    $region9: #{network_forward.1} parent=1 // pred_fallthru
      _
    // Predicated region
    $region10: #{network_forward.1} parent=1 // pred_check
      _
    $region11: #{network_forward.1} parent=1 // pred_check_branch
      %22 = sbr.rel (0) target = $region13
    $region12: #{network_forward.1} parent=1 // pred_region
      %s24 = ssub.s32 256, 256
      %25 = vsyncadd [#allocation3], %s24
      %s26 = sshll.u32 [#allocation2], 4
      %s27 = int_to_ptr.vmem [resolvable:$true] %s26
      %32 = dma.hbm_to_vmem [thread:$0]  %s2, 256, %s27, [#allocation3], 64, 64, 4
    $region13: #{network_forward.1} parent=1 // pred_fallthru
      _
    // Predicated region
    $region14: #{network_forward.1} parent=1 // pred_check
      _
    $region15: #{network_forward.1} parent=1 // pred_check_branch
      %34 = sbr.rel (0) target = $region17
    $region16: #{network_forward.1} parent=1 // pred_region
      _
    $region17: #{network_forward.1} parent=1 // pred_fallthru
      _
    // Predicated region
    $region18: #{network_forward.1} parent=1 // pred_check
      _
    $region19: #{network_forward.1} parent=1 // pred_check_branch
      %36 = sbr.rel (0) target = $region21
    $region20: #{network_forward.1} parent=1 // pred_region
      _
    $region21: #{network_forward.1} parent=1 // pred_fallthru
      _
    // Predicated region
    $region22: #{network_forward.1} parent=1 // pred_check
      _
    $region23: #{network_forward.1} parent=1 // pred_check_branch
      %38 = sbr.rel (0) target = $region25
    $region24: #{network_forward.1} parent=1 // pred_region
      _
    $region25: #{network_forward.1} parent=1 // pred_fallthru
      _
    // Predicated region
    $region26: #{network_forward.1} parent=1 // pred_check
      _
    $region27: #{network_forward.1} parent=1 // pred_check_branch
      %40 = sbr.rel (0) target = $region29
    $region28: #{network_forward.1} parent=1 // pred_region
      %s42 = ssub.s32 1024, 1024
      %43 = vsyncadd [#allocation5], %s42
      %s44 = sshll.u32 [#allocation4], 4
      %s45 = int_to_ptr.vmem [resolvable:$true] %s44
      %50 = dma.hbm_to_vmem [thread:$0]  %s6, 1024, %s45, [#allocation5], 64, 64, 4
    $region29: #{network_forward.1} parent=1 // pred_fallthru
      _
    // Predicated region
    $region30: #{network_forward.1} parent=1 // pred_check
      _
    $region31: #{network_forward.1} parent=1 // pred_check_branch
      %52 = sbr.rel (0) target = $region33
    $region32: #{network_forward.1} parent=1 // pred_region
      _
    $region33: #{network_forward.1} parent=1 // pred_fallthru
      _
    // Predicated region
    $region34: #{network_forward.1} parent=1 // pred_check
      _
    $region35: #{network_forward.1} parent=1 // pred_check_branch
      %54 = sbr.rel (0) target = $region37
    $region36: #{network_forward.1} parent=1 // pred_region
      %55 = dma.done [#allocation3], 256
    $region37: #{network_forward.1} parent=1 // pred_fallthru
      _
    // Predicated region
    $region38: #{network_forward.1} parent=1 // pred_check
      _
    $region39: #{network_forward.1} parent=1 // pred_check_branch
      %57 = sbr.rel (0) target = $region41
    $region40: #{network_forward.1} parent=1 // pred_region
      %58 = dma.done [#allocation5], 1024
    $region41: #{network_forward.1} parent=1 // pred_fallthru
      _
    %v60 = vld [vmem:[#allocation2] sm:$0xf]
    %v61 = vld [vmem:[#allocation2 + $0x4] sm:$0xf]
    %v62 = vld [vmem:[#allocation2 + $0x8] sm:$0xf]
    %v63 = vld [vmem:[#allocation2 + $0xc] sm:$0xf]
    %v64 = vld [vmem:[%s3] sm:$0x1]
    %v65 = vld [vmem:[%s4] sm:$0xf]
    %v66 = vld [vmem:[%s4 + $0x4] sm:$0xf]
    %v67 = vld [vmem:[%s4 + $0x8] sm:$0xf]
    %v68 = vld [vmem:[%s4 + $0xc] sm:$0xf]
    %v69 = vld [vmem:[%s4 + $0x10] sm:$0xf]
    %v70 = vld [vmem:[%s4 + $0x14] sm:$0xf]
    %v71 = vld [vmem:[%s4 + $0x18] sm:$0xf]
    %v72 = vld [vmem:[%s4 + $0x1c] sm:$0xf]
    %v73 = vld [vmem:[%s4 + $0x20] sm:$0xf]
    %v74 = vld [vmem:[%s4 + $0x24] sm:$0xf]
    %v75 = vld [vmem:[%s4 + $0x28] sm:$0xf]
    %v76 = vld [vmem:[%s4 + $0x2c] sm:$0xf]
    %v77 = vld [vmem:[%s4 + $0x30] sm:$0xf]
    %v78 = vld [vmem:[%s4 + $0x34] sm:$0xf]
    %v79 = vld [vmem:[%s4 + $0x38] sm:$0xf]
    %v80 = vld [vmem:[%s4 + $0x3c] sm:$0xf]
    %v81 = vld [vmem:[%s5] sm:$0x1]
    %v82 = vld [vmem:[#allocation4] sm:$0xf]
    %v83 = vld [vmem:[#allocation4 + $0x4] sm:$0xf]
    %v84 = vld [vmem:[#allocation4 + $0x8] sm:$0xf]
    %v85 = vld [vmem:[#allocation4 + $0xc] sm:$0xf]
    %v86 = vld [vmem:[#allocation4 + $0x10] sm:$0xf]
    %v87 = vld [vmem:[#allocation4 + $0x14] sm:$0xf]
    %v88 = vld [vmem:[#allocation4 + $0x18] sm:$0xf]
    %v89 = vld [vmem:[#allocation4 + $0x1c] sm:$0xf]
    %v90 = vld [vmem:[#allocation4 + $0x20] sm:$0xf]
    %v91 = vld [vmem:[#allocation4 + $0x24] sm:$0xf]
    %v92 = vld [vmem:[#allocation4 + $0x28] sm:$0xf]
    %v93 = vld [vmem:[#allocation4 + $0x2c] sm:$0xf]
    %v94 = vld [vmem:[#allocation4 + $0x30] sm:$0xf]
    %v95 = vld [vmem:[#allocation4 + $0x34] sm:$0xf]
    %v96 = vld [vmem:[#allocation4 + $0x38] sm:$0xf]
    %v97 = vld [vmem:[#allocation4 + $0x3c] sm:$0xf]
    %v98 = vld [vmem:[%s7] sm:$0x1]
    %v99 = vld [vmem:[%s0] sm:$0xff]
    %v100 = vld [vmem:[%s0 + $0x8] sm:$0xff]
    %v101 = vpack.c.bf16 %v100, %v99
    %v103 = vlaneseq
    %v104 = vshrl.u32 %v103, 7
    %v105 = vsub.s32 0, %v104
    %v106 = vrot.slane %v64, %v105
    %v112 = vunpack.c.l.b16 %v60
    %v113 = vunpack.c.l.b16 %v61
    %v114 = vunpack.c.l.b16 %v62
    %v115 = vunpack.c.l.b16 %v63
    %v116 = vpack.c.b16 %v113, %v112
    %v117 = vpack.c.b16 %v115, %v114
    %vm120 = vcmask 261120
    %v122 = vsel %vm120, %v101, 0
    %124 = vmatprep.subr.bf16.mxu0 0
    %125 = vmatpush1.bf16.msra.mxu0 %v116
    %126 = vmatprep.subr.bf16.mxu0 0
    %127 = vmatpush1.bf16.msra.mxu0 %v117
    %128 = vmatprep.subr.bf16.mxu0 0
    %129 = vmatpush1.bf16.msra.mxu0 0
    %130 = vmatprep.subr.bf16.mxu0 0
    %131 = vmatpush1.bf16.msra.mxu0 0
    %132 = vmatprep.subr.bf16.mxu0 0
    %133 = vmatpush1.bf16.msra.mxu0 0
    %134 = vmatprep.subr.bf16.mxu0 0
    %135 = vmatpush1.bf16.msra.mxu0 0
    %136 = vmatprep.subr.bf16.mxu0 0
    %137 = vmatpush1.bf16.msra.mxu0 0
    %138 = vmatprep.subr.bf16.mxu0 0
    %139 = vmatpush1.bf16.msra.mxu0 0
    %140 = vmatprep.subr.bf16.mxu0 0
    %141 = vmatpush1.bf16.msra.mxu0 0
    %142 = vmatprep.subr.bf16.mxu0 0
    %143 = vmatpush1.bf16.msra.mxu0 0
    %144 = vmatprep.subr.bf16.mxu0 0
    %145 = vmatpush1.bf16.msra.mxu0 0
    %146 = vmatprep.subr.bf16.mxu0 0
    %147 = vmatpush1.bf16.msra.mxu0 0
    %148 = vmatprep.subr.bf16.mxu0 0
    %149 = vmatpush1.bf16.msra.mxu0 0
    %150 = vmatprep.subr.bf16.mxu0 0
    %151 = vmatpush1.bf16.msra.mxu0 0
    %152 = vmatprep.subr.bf16.mxu0 0
    %153 = vmatpush1.bf16.msra.mxu0 0
    %154 = vmatprep.subr.bf16.mxu0 0
    %155 = vmatpush1.bf16.msra.mxu0 0
    %156 = vmatprep.mubr.bf16.mxu0 0
    %157 = vmatmul.mubr.bf16.gmra.mrb[0].mxu0 %v122
    %v158 = vpop.f32.mrb[0].mxu0
    %v159 = vadd.f32 %v106, %v158
    %v160 = vpop.f32.mrb[0].mxu0
    %v161 = vpop.f32.mrb[0].mxu0
    %v162 = vadd.f32 %v106, %v161
    %v163 = vpop.f32.mrb[0].mxu0
    %164 = vdwg.mxu0
    %v165 = vmax.f32 %v159, 0.0
    %v166 = vmax.f32 %v162, 0.0
    %v167 = vpack.c.bf16 %v166, %v165
    %v169 = vlaneseq
    %v170 = vshrl.u32 %v169, 7
    %v171 = vsub.s32 0, %v170
    %v172 = vrot.slane %v81, %v171
    %v190 = vunpack.c.l.b16 %v65
    %v191 = vunpack.c.l.b16 %v66
    %v192 = vunpack.c.l.b16 %v67
    %v193 = vunpack.c.l.b16 %v68
    %v194 = vunpack.c.l.b16 %v69
    %v195 = vunpack.c.l.b16 %v70
    %v196 = vunpack.c.l.b16 %v71
    %v197 = vunpack.c.l.b16 %v72
    %v198 = vunpack.c.l.b16 %v73
    %v199 = vunpack.c.l.b16 %v74
    %v200 = vunpack.c.l.b16 %v75
    %v201 = vunpack.c.l.b16 %v76
    %v202 = vunpack.c.l.b16 %v77
    %v203 = vunpack.c.l.b16 %v78
    %v204 = vunpack.c.l.b16 %v79
    %v205 = vunpack.c.l.b16 %v80
    %v206 = vpack.c.b16 %v191, %v190
    %v207 = vpack.c.b16 %v193, %v192
    %v208 = vpack.c.b16 %v195, %v194
    %v209 = vpack.c.b16 %v197, %v196
    %v210 = vpack.c.b16 %v199, %v198
    %v211 = vpack.c.b16 %v201, %v200
    %v212 = vpack.c.b16 %v203, %v202
    %v213 = vpack.c.b16 %v205, %v204
    %222 = vmatprep.subr.bf16.mxu0 0
    %223 = vmatpush1.bf16.msra.mxu0 %v206
    %224 = vmatprep.subr.bf16.mxu0 0
    %225 = vmatpush1.bf16.msra.mxu0 %v207
    %226 = vmatprep.subr.bf16.mxu0 0
    %227 = vmatpush1.bf16.msra.mxu0 %v208
    %228 = vmatprep.subr.bf16.mxu0 0
    %229 = vmatpush1.bf16.msra.mxu0 %v209
    %230 = vmatprep.subr.bf16.mxu0 0
    %231 = vmatpush1.bf16.msra.mxu0 %v210
    %232 = vmatprep.subr.bf16.mxu0 0
    %233 = vmatpush1.bf16.msra.mxu0 %v211
    %234 = vmatprep.subr.bf16.mxu0 0
    %235 = vmatpush1.bf16.msra.mxu0 %v212
    %236 = vmatprep.subr.bf16.mxu0 0
    %237 = vmatpush1.bf16.msra.mxu0 %v213
    %238 = vmatprep.subr.bf16.mxu0 0
    %239 = vmatpush1.bf16.msra.mxu0 0
    %240 = vmatprep.subr.bf16.mxu0 0
    %241 = vmatpush1.bf16.msra.mxu0 0
    %242 = vmatprep.subr.bf16.mxu0 0
    %243 = vmatpush1.bf16.msra.mxu0 0
    %244 = vmatprep.subr.bf16.mxu0 0
    %245 = vmatpush1.bf16.msra.mxu0 0
    %246 = vmatprep.subr.bf16.mxu0 0
    %247 = vmatpush1.bf16.msra.mxu0 0
    %248 = vmatprep.subr.bf16.mxu0 0
    %249 = vmatpush1.bf16.msra.mxu0 0
    %250 = vmatprep.subr.bf16.mxu0 0
    %251 = vmatpush1.bf16.msra.mxu0 0
    %252 = vmatprep.subr.bf16.mxu0 0
    %253 = vmatpush1.bf16.msra.mxu0 0
    %254 = vmatprep.mubr.bf16.mxu0 0
    %255 = vmatmul.mubr.bf16.gmra.mrb[0].mxu0 %v167
    %v256 = vpop.f32.mrb[0].mxu0
    %v257 = vadd.f32 %v172, %v256
    %v258 = vpop.f32.mrb[0].mxu0
    %v259 = vpop.f32.mrb[0].mxu0
    %v260 = vadd.f32 %v172, %v259
    %v261 = vpop.f32.mrb[0].mxu0
    %262 = vdwg.mxu0
    %v263 = vmax.f32 %v257, 0.0
    %v264 = vmax.f32 %v260, 0.0
    %v265 = vpack.c.bf16 %v264, %v263
    %v267 = vlaneseq
    %v268 = vshrl.u32 %v267, 7
    %v269 = vsub.s32 0, %v268
    %v270 = vrot.slane %v98, %v269
    %v288 = vunpack.c.l.b16 %v82
    %v289 = vunpack.c.l.b16 %v83
    %v290 = vunpack.c.l.b16 %v84
    %v291 = vunpack.c.l.b16 %v85
    %v292 = vunpack.c.l.b16 %v86
    %v293 = vunpack.c.l.b16 %v87
    %v294 = vunpack.c.l.b16 %v88
    %v295 = vunpack.c.l.b16 %v89
    %v296 = vunpack.c.l.b16 %v90
    %v297 = vunpack.c.l.b16 %v91
    %v298 = vunpack.c.l.b16 %v92
    %v299 = vunpack.c.l.b16 %v93
    %v300 = vunpack.c.l.b16 %v94
    %v301 = vunpack.c.l.b16 %v95
    %v302 = vunpack.c.l.b16 %v96
    %v303 = vunpack.c.l.b16 %v97
    %v304 = vpack.c.b16 %v289, %v288
    %v305 = vpack.c.b16 %v291, %v290
    %v306 = vpack.c.b16 %v293, %v292
    %v307 = vpack.c.b16 %v295, %v294
    %v308 = vpack.c.b16 %v297, %v296
    %v309 = vpack.c.b16 %v299, %v298
    %v310 = vpack.c.b16 %v301, %v300
    %v311 = vpack.c.b16 %v303, %v302
    %320 = vmatprep.subr.bf16.mxu0 0
    %321 = vmatpush1.bf16.msra.mxu0 %v304
    %322 = vmatprep.subr.bf16.mxu0 0
    %323 = vmatpush1.bf16.msra.mxu0 %v305
    %324 = vmatprep.subr.bf16.mxu0 0
    %325 = vmatpush1.bf16.msra.mxu0 %v306
    %326 = vmatprep.subr.bf16.mxu0 0
    %327 = vmatpush1.bf16.msra.mxu0 %v307
    %328 = vmatprep.subr.bf16.mxu0 0
    %329 = vmatpush1.bf16.msra.mxu0 %v308
    %330 = vmatprep.subr.bf16.mxu0 0
    %331 = vmatpush1.bf16.msra.mxu0 %v309
    %332 = vmatprep.subr.bf16.mxu0 0
    %333 = vmatpush1.bf16.msra.mxu0 %v310
    %334 = vmatprep.subr.bf16.mxu0 0
    %335 = vmatpush1.bf16.msra.mxu0 %v311
    %336 = vmatprep.subr.bf16.mxu0 0
    %337 = vmatpush1.bf16.msra.mxu0 0
    %338 = vmatprep.subr.bf16.mxu0 0
    %339 = vmatpush1.bf16.msra.mxu0 0
    %340 = vmatprep.subr.bf16.mxu0 0
    %341 = vmatpush1.bf16.msra.mxu0 0
    %342 = vmatprep.subr.bf16.mxu0 0
    %343 = vmatpush1.bf16.msra.mxu0 0
    %344 = vmatprep.subr.bf16.mxu0 0
    %345 = vmatpush1.bf16.msra.mxu0 0
    %346 = vmatprep.subr.bf16.mxu0 0
    %347 = vmatpush1.bf16.msra.mxu0 0
    %348 = vmatprep.subr.bf16.mxu0 0
    %349 = vmatpush1.bf16.msra.mxu0 0
    %350 = vmatprep.subr.bf16.mxu0 0
    %351 = vmatpush1.bf16.msra.mxu0 0
    %352 = vmatprep.mubr.bf16.mxu0 0
    %353 = vmatmul.mubr.bf16.gmra.mrb[0].mxu0 %v265
    %v354 = vpop.f32.mrb[0].mxu0
    %v355 = vadd.f32 %v270, %v354
    %v356 = vpop.f32.mrb[0].mxu0
    %v357 = vpop.f32.mrb[0].mxu0
    %v358 = vadd.f32 %v270, %v357
    %v359 = vpop.f32.mrb[0].mxu0
    %360 = vdwg.mxu0
    %v361 = vmul.f32 %v355, %v355
    %v362 = vmul.f32 %v358, %v358
    %363 = vadd.xlane.f32.xlu0 %v361
    %v364 = vpop.xlane.xlu0 %363
    %365 = vadd.xlane.f32.xlu0 %v362
    %v366 = vpop.xlane.xlu0 %365
    %v367 = vmax.f32 %v364, 1e-24
    %v368 = vmax.f32 %v366, 1e-24
    %v369 = vrsqrt.pop %v367
    %v370 = vrsqrt.pop %v368
    %v371 = vmul.f32 %v355, %v369
    %v372 = vmul.f32 %v358, %v370
    %373 = vst [vmem:[%s8] sm:$0xff] %v371
    %374 = vst [vmem:[%s8 + $0x8] sm:$0xff] %v372
    %v375 = vld [vmem:[%s1] sm:$0xff]
    %v376 = vld [vmem:[%s1 + $0x8] sm:$0xff]
    %v377 = vpack.c.bf16 %v376, %v375
    %v379 = vsel %vm120, %v377, 0
    %381 = vmatprep.subr.bf16.mxu0 0
    %382 = vmatpush1.bf16.msra.mxu0 %v116
    %383 = vmatprep.subr.bf16.mxu0 0
    %384 = vmatpush1.bf16.msra.mxu0 %v117
    %385 = vmatprep.subr.bf16.mxu0 0
    %386 = vmatpush1.bf16.msra.mxu0 0
    %387 = vmatprep.subr.bf16.mxu0 0
    %388 = vmatpush1.bf16.msra.mxu0 0
    %389 = vmatprep.subr.bf16.mxu0 0
    %390 = vmatpush1.bf16.msra.mxu0 0
    %391 = vmatprep.subr.bf16.mxu0 0
    %392 = vmatpush1.bf16.msra.mxu0 0
    %393 = vmatprep.subr.bf16.mxu0 0
    %394 = vmatpush1.bf16.msra.mxu0 0
    %395 = vmatprep.subr.bf16.mxu0 0
    %396 = vmatpush1.bf16.msra.mxu0 0
    %397 = vmatprep.subr.bf16.mxu0 0
    %398 = vmatpush1.bf16.msra.mxu0 0
    %399 = vmatprep.subr.bf16.mxu0 0
    %400 = vmatpush1.bf16.msra.mxu0 0
    %401 = vmatprep.subr.bf16.mxu0 0
    %402 = vmatpush1.bf16.msra.mxu0 0
    %403 = vmatprep.subr.bf16.mxu0 0
    %404 = vmatpush1.bf16.msra.mxu0 0
    %405 = vmatprep.subr.bf16.mxu0 0
    %406 = vmatpush1.bf16.msra.mxu0 0
    %407 = vmatprep.subr.bf16.mxu0 0
    %408 = vmatpush1.bf16.msra.mxu0 0
    %409 = vmatprep.subr.bf16.mxu0 0
    %410 = vmatpush1.bf16.msra.mxu0 0
    %411 = vmatprep.subr.bf16.mxu0 0
    %412 = vmatpush1.bf16.msra.mxu0 0
    %413 = vmatprep.mubr.bf16.mxu0 0
    %414 = vmatmul.mubr.bf16.gmra.mrb[0].mxu0 %v379
    %v415 = vpop.f32.mrb[0].mxu0
    %v416 = vadd.f32 %v106, %v415
    %v417 = vpop.f32.mrb[0].mxu0
    %v418 = vpop.f32.mrb[0].mxu0
    %v419 = vadd.f32 %v106, %v418
    %v420 = vpop.f32.mrb[0].mxu0
    %421 = vdwg.mxu0
    %v422 = vmax.f32 %v416, 0.0
    %v423 = vmax.f32 %v419, 0.0
    %v424 = vpack.c.bf16 %v423, %v422
    %425 = vmatprep.subr.bf16.mxu0 0
    %426 = vmatpush1.bf16.msra.mxu0 %v206
    %427 = vmatprep.subr.bf16.mxu0 0
    %428 = vmatpush1.bf16.msra.mxu0 %v207
    %429 = vmatprep.subr.bf16.mxu0 0
    %430 = vmatpush1.bf16.msra.mxu0 %v208
    %431 = vmatprep.subr.bf16.mxu0 0
    %432 = vmatpush1.bf16.msra.mxu0 %v209
    %433 = vmatprep.subr.bf16.mxu0 0
    %434 = vmatpush1.bf16.msra.mxu0 %v210
    %435 = vmatprep.subr.bf16.mxu0 0
    %436 = vmatpush1.bf16.msra.mxu0 %v211
    %437 = vmatprep.subr.bf16.mxu0 0
    %438 = vmatpush1.bf16.msra.mxu0 %v212
    %439 = vmatprep.subr.bf16.mxu0 0
    %440 = vmatpush1.bf16.msra.mxu0 %v213
    %441 = vmatprep.subr.bf16.mxu0 0
    %442 = vmatpush1.bf16.msra.mxu0 0
    %443 = vmatprep.subr.bf16.mxu0 0
    %444 = vmatpush1.bf16.msra.mxu0 0
    %445 = vmatprep.subr.bf16.mxu0 0
    %446 = vmatpush1.bf16.msra.mxu0 0
    %447 = vmatprep.subr.bf16.mxu0 0
    %448 = vmatpush1.bf16.msra.mxu0 0
    %449 = vmatprep.subr.bf16.mxu0 0
    %450 = vmatpush1.bf16.msra.mxu0 0
    %451 = vmatprep.subr.bf16.mxu0 0
    %452 = vmatpush1.bf16.msra.mxu0 0
    %453 = vmatprep.subr.bf16.mxu0 0
    %454 = vmatpush1.bf16.msra.mxu0 0
    %455 = vmatprep.subr.bf16.mxu0 0
    %456 = vmatpush1.bf16.msra.mxu0 0
    %457 = vmatprep.mubr.bf16.mxu0 0
    %458 = vmatmul.mubr.bf16.gmra.mrb[0].mxu0 %v424
    %v459 = vpop.f32.mrb[0].mxu0
    %v460 = vadd.f32 %v172, %v459
    %v461 = vpop.f32.mrb[0].mxu0
    %v462 = vpop.f32.mrb[0].mxu0
    %v463 = vadd.f32 %v172, %v462
    %v464 = vpop.f32.mrb[0].mxu0
    %465 = vdwg.mxu0
    %v466 = vmax.f32 %v460, 0.0
    %v467 = vmax.f32 %v463, 0.0
    %v468 = vpack.c.bf16 %v467, %v466
    %469 = vmatprep.subr.bf16.mxu0 0
    %470 = vmatpush1.bf16.msra.mxu0 %v304
    %471 = vmatprep.subr.bf16.mxu0 0
    %472 = vmatpush1.bf16.msra.mxu0 %v305
    %473 = vmatprep.subr.bf16.mxu0 0
    %474 = vmatpush1.bf16.msra.mxu0 %v306
    %475 = vmatprep.subr.bf16.mxu0 0
    %476 = vmatpush1.bf16.msra.mxu0 %v307
    %477 = vmatprep.subr.bf16.mxu0 0
    %478 = vmatpush1.bf16.msra.mxu0 %v308
    %479 = vmatprep.subr.bf16.mxu0 0
    %480 = vmatpush1.bf16.msra.mxu0 %v309
    %481 = vmatprep.subr.bf16.mxu0 0
    %482 = vmatpush1.bf16.msra.mxu0 %v310
    %483 = vmatprep.subr.bf16.mxu0 0
    %484 = vmatpush1.bf16.msra.mxu0 %v311
    %485 = vmatprep.subr.bf16.mxu0 0
    %486 = vmatpush1.bf16.msra.mxu0 0
    %487 = vmatprep.subr.bf16.mxu0 0
    %488 = vmatpush1.bf16.msra.mxu0 0
    %489 = vmatprep.subr.bf16.mxu0 0
    %490 = vmatpush1.bf16.msra.mxu0 0
    %491 = vmatprep.subr.bf16.mxu0 0
    %492 = vmatpush1.bf16.msra.mxu0 0
    %493 = vmatprep.subr.bf16.mxu0 0
    %494 = vmatpush1.bf16.msra.mxu0 0
    %495 = vmatprep.subr.bf16.mxu0 0
    %496 = vmatpush1.bf16.msra.mxu0 0
    %497 = vmatprep.subr.bf16.mxu0 0
    %498 = vmatpush1.bf16.msra.mxu0 0
    %499 = vmatprep.subr.bf16.mxu0 0
    %500 = vmatpush1.bf16.msra.mxu0 0
    %501 = vmatprep.mubr.bf16.mxu0 0
    %502 = vmatmul.mubr.bf16.gmra.mrb[0].mxu0 %v468
    %v503 = vpop.f32.mrb[0].mxu0
    %v504 = vadd.f32 %v270, %v503
    %v505 = vpop.f32.mrb[0].mxu0
    %v506 = vpop.f32.mrb[0].mxu0
    %v507 = vadd.f32 %v270, %v506
    %v508 = vpop.f32.mrb[0].mxu0
    %509 = vdwg.mxu0
    %v510 = vmul.f32 %v504, %v504
    %v511 = vmul.f32 %v507, %v507
    %512 = vadd.xlane.f32.xlu0 %v510
    %v513 = vpop.xlane.xlu0 %512
    %514 = vadd.xlane.f32.xlu0 %v511
    %v515 = vpop.xlane.xlu0 %514
    %v516 = vmax.f32 %v513, 1e-24
    %v517 = vmax.f32 %v515, 1e-24
    %v518 = vrsqrt.pop %v516
    %v519 = vrsqrt.pop %v517
    %v520 = vmul.f32 %v504, %v518
    %v521 = vmul.f32 %v507, %v519
    %522 = vst [vmem:[%s9] sm:$0xff] %v520
    %523 = vst [vmem:[%s9 + $0x8] sm:$0xff] %v521
    // Predicated region
    $region42: #{network_forward.1} parent=1 // pred_check
      _
    $region43: #{network_forward.1} parent=1 // pred_check_branch
      %525 = sbr.rel (0) target = $region45
    $region44: #{network_forward.1} parent=1 // pred_region
      _
    $region45: #{network_forward.1} parent=1 // pred_fallthru
      _
    // Predicated region
    $region46: #{network_forward.1} parent=1 // pred_check
      _
    $region47: #{network_forward.1} parent=1 // pred_check_branch
      %527 = sbr.rel (0) target = $region49
    $region48: #{network_forward.1} parent=1 // pred_region
      _
    $region49: #{network_forward.1} parent=1 // pred_fallthru
      _
    // Predicated region
    $region50: #{network_forward.1} parent=1 // pred_check
      _
    $region51: #{network_forward.1} parent=1 // pred_check_branch
      %529 = sbr.rel (0) target = $region53
    $region52: #{network_forward.1} parent=1 // pred_region
      _
    $region53: #{network_forward.1} parent=1 // pred_fallthru
      _
    // Predicated region
    $region54: #{network_forward.1} parent=1 // pred_check
      _
    $region55: #{network_forward.1} parent=1 // pred_check_branch
      %531 = sbr.rel (0) target = $region57
    $region56: #{network_forward.1} parent=1 // pred_region
      _
    $region57: #{network_forward.1} parent=1 // pred_fallthru
      _
    %532 = vsyncpa [#allocation3], 1
    %533 = vsyncpa [#allocation5], 1

</llo_original>
